<compile_context>
chip_gen: v5e
topology: v5e:2x2
jax: 0.10.0
libtpu: 0.0.40
codegen_flags: <defaults>
</compile_context>

<pallas_src>
import functools

import jax
import jax.numpy as jnp
from jax.experimental import pallas as pl
from jax.experimental.pallas import tpu as pltpu


def _round_up(x, m):
    return ((x + m - 1) // m) * m


def _msle_kernel(yhat_ref, y_ref, mask_ref, seqlen_ref, rowloss_ref, acc_ref,
                 *, sum_losses):
    """Grid = (batch tiles, T tiles). T is the (inner, 'arbitrary') reduction axis."""
    j = pl.program_id(1)

    @pl.when(j == 0)
    def _init():
        acc_ref[...] = jnp.zeros_like(acc_ref)

    m = mask_ref[...] != 0                              # int8 -> bool, (TB, TT)
    log_yhat = jnp.log(yhat_ref[...].astype(jnp.float32))
    log_y = jnp.log(y_ref[...].astype(jnp.float32))
    # where(m, log_yhat, 0) - where(m, log_y, 0) == where(m, log_yhat - log_y, 0)
    d = jnp.where(m, log_yhat - log_y, 0.0)
    acc_ref[...] += jnp.sum(d * d, axis=1, keepdims=True)   # (TB, 1) row partials

    @pl.when(j == pl.num_programs(1) - 1)
    def _finalize():
        row = acc_ref[...]
        if not sum_losses:
            # torch: loss / seq_length.clamp(min=1)
            row = row / jnp.maximum(seqlen_ref[...], 1.0)
        rowloss_ref[...] = row


def msle_loss(y_hat, y, mask, seq_length, sum_losses=False):
    """Pallas implementation of MSLELoss.forward. Returns a scalar f32."""
    B, T = y_hat.shape

    # ---- tile sizes ------------------------------------------------------
    # Lane (T) tile: multiple of 128, capped at 1024 -> per-step footprint of
    # 3 inputs x 2 pipeline buffers stays a few MiB (fits v7x 64 MiB VMEM).
    if T <= 1024:
        TT = _round_up(T, 128)
    else:
        TT = 1024
    T_pad = _round_up(T, TT)
    # Sublane (B) tile: full (padded) batch or a multiple of 32 (int8 tiling).
    if B <= 256:
        TB = _round_up(B, 32)
        B_pad = TB
    else:
        TB = 256
        B_pad = _round_up(B, TB)
    nb, nt = B_pad // TB, T_pad // TT
    pad_b, pad_t = B_pad - B, T_pad - T

    # ---- wrapper-side prep (no f32 upcast of the big operands) -----------
    mask_i8 = mask.astype(jnp.int8)                 # 1 byte/elem in HBM
    seq_f = seq_length.astype(jnp.float32)
    if pad_b or pad_t:
        y_hat_p = jnp.pad(y_hat, ((0, pad_b), (0, pad_t)), constant_values=1)
        y_p = jnp.pad(y, ((0, pad_b), (0, pad_t)), constant_values=1)
        mask_p = jnp.pad(mask_i8, ((0, pad_b), (0, pad_t)))   # padded -> masked out
        seq_p = jnp.pad(seq_f, (0, pad_b), constant_values=1)
    else:
        y_hat_p, y_p, mask_p, seq_p = y_hat, y, mask_i8, seq_f
    seq_p = seq_p.reshape(B_pad, 1)

    kernel = functools.partial(_msle_kernel, sum_losses=sum_losses)

    row_losses = pl.pallas_call(
        kernel,
        out_shape=jax.ShapeDtypeStruct((B_pad, 1), jnp.float32),
        grid_spec=pltpu.PrefetchScalarGridSpec(
            num_scalar_prefetch=0,
            grid=(nb, nt),
            in_specs=[
                pl.BlockSpec((TB, TT), lambda i, j: (i, j)),   # y_hat (native dtype)
                pl.BlockSpec((TB, TT), lambda i, j: (i, j)),   # y     (native dtype)
                pl.BlockSpec((TB, TT), lambda i, j: (i, j)),   # mask  (int8)
                pl.BlockSpec((TB, 1), lambda i, j: (i, 0)),    # seq_length (f32)
            ],
            out_specs=pl.BlockSpec((TB, 1), lambda i, j: (i, 0)),  # per-row loss
            scratch_shapes=[pltpu.VMEM((TB, 1), jnp.float32)],     # row accumulator
        ),
        compiler_params=pltpu.CompilerParams(
            dimension_semantics=("parallel", "arbitrary")),
    )(y_hat_p, y_p, mask_p, seq_p)

    # loss.mean() over the ORIGINAL batch; padded rows are exactly 0.
    return jnp.sum(row_losses) / B


def _msle_loss_ref(y_hat, y, mask, seq_length, sum_losses=False):
    """Pure-JAX reference mirroring the PyTorch forward exactly."""
    m = mask.astype(bool)
    log_yhat = jnp.where(m, jnp.log(y_hat.astype(jnp.float32)), 0.0)
    log_y = jnp.where(m, jnp.log(y.astype(jnp.float32)), 0.0)
    loss = (log_yhat - log_y) ** 2
    loss = jnp.sum(loss, axis=1)
    if not sum_losses:
        loss = loss / jnp.maximum(seq_length.astype(jnp.float32), 1.0)
    return jnp.mean(loss)


if __name__ == "__main__":
    key = jax.random.PRNGKey(0)
    k1, k2, k3, k4 = jax.random.split(key, 4)

    # Small case matching the module convention: (batch, seq).
    B, T = 4, 16
    y_hat = jax.random.uniform(k1, (B, T), jnp.float32, minval=0.1, maxval=3.0)
    y = jax.random.uniform(k2, (B, T), jnp.float32, minval=0.1, maxval=3.0)
    mask = jax.random.bernoulli(k3, p=0.7, shape=(B, T))
    seq_length = jax.random.randint(k4, (B,), minval=0, maxval=T + 1)
    # Exercise log(0)/log(negative) under masked-out entries (select semantics).
    mask = mask.at[0, 0].set(False)
    y_hat = y_hat.at[0, 0].set(0.0)
    y = y.at[0, 0].set(-1.0)

    out = jax.block_until_ready(msle_loss(y_hat, y, mask, seq_length))
    ref = _msle_loss_ref(y_hat, y, mask, seq_length)
    assert jnp.allclose(out, ref, rtol=1e-5, atol=1e-6), (out, ref)

    out_sum = jax.block_until_ready(
        msle_loss(y_hat, y, mask, seq_length, sum_losses=True))
    ref_sum = _msle_loss_ref(y_hat, y, mask, seq_length, sum_losses=True)
    assert jnp.allclose(out_sum, ref_sum, rtol=1e-5, atol=1e-6), (out_sum, ref_sum)

    # Larger case exercising multiple T tiles, padded rows/cols and int8 mask.
    B2, T2 = 40, 1536
    kk = jax.random.split(jax.random.PRNGKey(1), 4)
    yh2 = jax.random.uniform(kk[0], (B2, T2), jnp.float32, minval=0.1, maxval=3.0)
    y2 = jax.random.uniform(kk[1], (B2, T2), jnp.float32, minval=0.1, maxval=3.0)
    m2 = jax.random.bernoulli(kk[2], p=0.6, shape=(B2, T2))
    s2 = jax.random.randint(kk[3], (B2,), minval=0, maxval=T2 + 1)
    out2 = jax.block_until_ready(msle_loss(yh2, y2, m2, s2))
    ref2 = _msle_loss_ref(yh2, y2, m2, s2)
    assert jnp.allclose(out2, ref2, rtol=1e-5, atol=1e-6), (out2, ref2)

    print("KERNEL_OK")
</pallas_src>

<mosaic_0001>
module attributes {stable_mosaic.version = 11 : i64} {
  func.func @_msle_kernel(%arg0: i32, %arg1: i32, %arg2: memref<32x128xf32, #tpu.memory_space<vmem>>, %arg3: memref<32x128xf32, #tpu.memory_space<vmem>>, %arg4: memref<32x128xi8, #tpu.memory_space<vmem>>, %arg5: memref<32x1xf32, #tpu.memory_space<vmem>>, %arg6: memref<32x1xf32, #tpu.memory_space<vmem>>, %arg7: memref<32x1xf32, #tpu.memory_space<vmem>>) attributes {dimension_semantics = [#tpu.dimension_semantics<parallel>, #tpu.dimension_semantics<arbitrary>], iteration_bounds = array<i64: 1, 1>, scalar_prefetch = 0 : i64, scratch_operands = 1 : i64, tpu.core_type = #tpu.core_type<tc>, window_params = [{transform_indices = @transform_0, window_bounds = array<i64: 32, 128>}, {transform_indices = @transform_1, window_bounds = array<i64: 32, 128>}, {transform_indices = @transform_2, window_bounds = array<i64: 32, 128>}, {transform_indices = @transform_3, window_bounds = array<i64: 32, 1>}, {transform_indices = @transform_4, window_bounds = array<i64: 32, 1>}]} {
    %c0_i32 = arith.constant 0 : i32
    %0 = arith.cmpi eq, %arg1, %c0_i32 : i32
    %1 = arith.extui %0 : i1 to i32
    %c0_i32_0 = arith.constant 0 : i32
    %2 = arith.cmpi ne, %1, %c0_i32_0 : i32
    scf.if %2 {
      %cst_13 = arith.constant 0.000000e+00 : f32
      %22 = vector.broadcast %cst_13 : f32 to vector<32x1xf32>
      %c0_14 = arith.constant 0 : index
      %c0_15 = arith.constant 0 : index
      %23 = vector.load %arg7[%c0_14, %c0_15] : memref<32x1xf32, #tpu.memory_space<vmem>>, vector<32x1xf32>
      tpu.vector_store %arg7[%c0_14, %c0_15], %22 {strides = array<i32>} : memref<32x1xf32, #tpu.memory_space<vmem>>, vector<32x1xf32>,
    } else {
    }
    %c0 = arith.constant 0 : index
    %c0_1 = arith.constant 0 : index
    %3 = vector.load %arg4[%c0, %c0_1] : memref<32x128xi8, #tpu.memory_space<vmem>>, vector<32x128xi8>
    %c0_i8 = arith.constant 0 : i8
    %4 = vector.broadcast %c0_i8 : i8 to vector<32x128xi8>
    %5 = arith.cmpi ne, %3, %4 : vector<32x128xi8>
    %c0_2 = arith.constant 0 : index
    %c0_3 = arith.constant 0 : index
    %6 = vector.load %arg2[%c0_2, %c0_3] : memref<32x128xf32, #tpu.memory_space<vmem>>, vector<32x128xf32>
    %7 = math.log %6 : vector<32x128xf32>
    %c0_4 = arith.constant 0 : index
    %c0_5 = arith.constant 0 : index
    %8 = vector.load %arg3[%c0_4, %c0_5] : memref<32x128xf32, #tpu.memory_space<vmem>>, vector<32x128xf32>
    %9 = math.log %8 : vector<32x128xf32>
    %10 = arith.subf %7, %9 : vector<32x128xf32>
    %cst = arith.constant 0.000000e+00 : f32
    %11 = vector.broadcast %cst : f32 to vector<32x128xf32>
    %12 = arith.select %5, %10, %11 : vector<32x128xi1>, vector<32x128xf32>
    %c0_6 = arith.constant 0 : index
    %c0_7 = arith.constant 0 : index
    %13 = vector.load %arg7[%c0_6, %c0_7] : memref<32x1xf32, #tpu.memory_space<vmem>>, vector<32x1xf32>
    %14 = arith.mulf %12, %12 : vector<32x128xf32>
    %cst_8 = arith.constant dense<0.000000e+00> : vector<32xf32>
    %15 = vector.multi_reduction <add>, %14, %cst_8 [1] : vector<32x128xf32> to vector<32xf32>
    %16 = vector.shape_cast %15 : vector<32xf32> to vector<32x1xf32>
    %17 = arith.addf %13, %16 : vector<32x1xf32>
    %c0_9 = arith.constant 0 : index
    %c0_10 = arith.constant 0 : index
    %18 = vector.load %arg7[%c0_9, %c0_10] : memref<32x1xf32, #tpu.memory_space<vmem>>, vector<32x1xf32>
    tpu.vector_store %arg7[%c0_9, %c0_10], %17 {strides = array<i32>} : memref<32x1xf32, #tpu.memory_space<vmem>>, vector<32x1xf32>,
    %c0_i32_11 = arith.constant 0 : i32
    %19 = arith.cmpi eq, %arg1, %c0_i32_11 : i32
    %20 = arith.extui %19 : i1 to i32
    %c0_i32_12 = arith.constant 0 : i32
    %21 = arith.cmpi ne, %20, %c0_i32_12 : i32
    scf.if %21 {
      %c0_13 = arith.constant 0 : index
      %c0_14 = arith.constant 0 : index
      %22 = vector.load %arg7[%c0_13, %c0_14] : memref<32x1xf32, #tpu.memory_space<vmem>>, vector<32x1xf32>
      %c0_15 = arith.constant 0 : index
      %c0_16 = arith.constant 0 : index
      %23 = vector.load %arg5[%c0_15, %c0_16] : memref<32x1xf32, #tpu.memory_space<vmem>>, vector<32x1xf32>
      %cst_17 = arith.constant 1.000000e+00 : f32
      %24 = vector.broadcast %cst_17 : f32 to vector<32x1xf32>
      %25 = arith.maximumf %23, %24 : vector<32x1xf32>
      %26 = arith.divf %22, %25 : vector<32x1xf32>
      %c0_18 = arith.constant 0 : index
      %c0_19 = arith.constant 0 : index
      %27 = vector.load %arg6[%c0_18, %c0_19] : memref<32x1xf32, #tpu.memory_space<vmem>>, vector<32x1xf32>
      tpu.vector_store %arg6[%c0_18, %c0_19], %26 {strides = array<i32>} : memref<32x1xf32, #tpu.memory_space<vmem>>, vector<32x1xf32>,
    } else {
    }
    return
  }
  func.func @transform_0(%arg0: i32, %arg1: i32) -> (i32, i32) {
    %c0_i32 = arith.constant 0 : i32
    return %arg0, %arg1 : i32, i32
  }
  func.func @transform_1(%arg0: i32, %arg1: i32) -> (i32, i32) {
    %c0_i32 = arith.constant 0 : i32
    return %arg0, %arg1 : i32, i32
  }
  func.func @transform_2(%arg0: i32, %arg1: i32) -> (i32, i32) {
    %c0_i32 = arith.constant 0 : i32
    return %arg0, %arg1 : i32, i32
  }
  func.func @transform_3(%arg0: i32, %arg1: i32) -> (i32, i32) {
    %c0_i32 = arith.constant 0 : i32
    %c0_i32_0 = arith.constant 0 : i32
    return %arg0, %c0_i32 : i32, i32
  }
  func.func @transform_4(%arg0: i32, %arg1: i32) -> (i32, i32) {
    %c0_i32 = arith.constant 0 : i32
    %c0_i32_0 = arith.constant 0 : i32
    return %arg0, %c0_i32 : i32, i32
  }
}

</mosaic_0001>

<llo_original>
// kernel: tpu_custom_call.1
$region0: #{tpu_custom_call.1}
  #allocation0 [shape = 'u32[]', space=smem, size = 0x4, offset = 0x4, fixed_abs, tag = 'smem constant byte address 0x4 - core index']
  #allocation1 [shape = 'u32[72,128]{1,0:T(1,128)}', space=vmem, size = 0x9000, scoped, tag = 'internal scratch']
  #allocation2 [shape = 'f32[32,1]{1,0:T(8,128)}', space=vmem, size = 0x4000, scoped, tag = 'scratch operand']
  %s0 = inlined_call_operand.vmem [shape: f32[32,128], index: 0, kind: input, shape index: {}]
  %s1 = inlined_call_operand.hbm [shape: f32[32,128], index: 1, kind: input, shape index: {}]
  %s2 = inlined_call_operand.hbm [shape: s8[32,128], index: 2, kind: input, shape index: {}]
  %s3 = inlined_call_operand.vmem [shape: f32[32,1], index: 3, kind: input, shape index: {}]
  %s4 = inlined_call_operand.vmem [shape: f32[32,1], index: 4, kind: output, shape index: {}]
  %s5 = sld [smem:[#allocation0]]
  $region42: #{tpu_custom_call.1} parent=0
    _
  %s7 = ssub.s32 1, %s5
  %s8 = scalar_select 0, %s7, %s5
  $region1: #{tpu_custom_call.1} parent=0
    #allocation3 [shape = 'u8[16384]{0}', space=vmem, size = 0x4000, scoped, tag = 'input window, operand 1, single buffered']
    #allocation4 [shape = 's32[1]{0}', space=sflag, size = 0x4, scoped, tag = 'scoped memory for tpu_custom_call.1']
    #allocation5 [shape = 'u8[4096]{0}', space=vmem, size = 0x1000, scoped, tag = 'input window, operand 2, single buffered']
    #allocation6 [shape = 's32[1]{0}', space=sflag, size = 0x4, scoped, tag = 'scoped memory for tpu_custom_call.1']
    %9 = vsyncpa [#allocation4], 0
    %10 = vsyncpa [#allocation6], 0
    // Predicated region
    $region2: #{tpu_custom_call.1} parent=1 // pred_check
      _
    $region3: #{tpu_custom_call.1} parent=1 // pred_check_branch
      %12 = sbr.rel (0) target = $region5
    $region4: #{tpu_custom_call.1} parent=1 // pred_region
      _
    $region5: #{tpu_custom_call.1} parent=1 // pred_fallthru
      _
    // Predicated region
    $region6: #{tpu_custom_call.1} parent=1 // pred_check
      _
    $region7: #{tpu_custom_call.1} parent=1 // pred_check_branch
      %14 = sbr.rel (0) target = $region9
    $region8: #{tpu_custom_call.1} parent=1 // pred_region
      %16 = vsyncadd [#allocation4], 0
      %s17 = sshll.u32 %s1, 4
      %s18 = int_to_ptr.hbm [resolvable:$true] %s17
      %s19 = sshll.u32 [#allocation3], 4
      %s20 = int_to_ptr.vmem [resolvable:$true] %s19
      %25 = dma.hbm_to_vmem [thread:$0]  %s18, 512, %s20, [#allocation4], 128, 128, 8
    $region9: #{tpu_custom_call.1} parent=1 // pred_fallthru
      _
    // Predicated region
    $region10: #{tpu_custom_call.1} parent=1 // pred_check
      _
    $region11: #{tpu_custom_call.1} parent=1 // pred_check_branch
      %27 = sbr.rel (0) target = $region13
    $region12: #{tpu_custom_call.1} parent=1 // pred_region
      %29 = vsyncadd [#allocation6], 0
      %s31 = sshll.u32 %s2, 4
      %s32 = int_to_ptr.hbm [resolvable:$true] %s31
      %s33 = sshll.u32 [#allocation5], 4
      %s34 = int_to_ptr.vmem [resolvable:$true] %s33
      %36 = dma.hbm_to_vmem [thread:$0]  %s32, 128, %s34, [#allocation6]
    $region13: #{tpu_custom_call.1} parent=1 // pred_fallthru
      _
    // Predicated region
    $region14: #{tpu_custom_call.1} parent=1 // pred_check
      _
    $region15: #{tpu_custom_call.1} parent=1 // pred_check_branch
      %38 = sbr.rel (0) target = $region17
    $region16: #{tpu_custom_call.1} parent=1 // pred_region
      _
    $region17: #{tpu_custom_call.1} parent=1 // pred_fallthru
      _
    // Predicated region
    $region18: #{tpu_custom_call.1} parent=1 // pred_check
      _
    $region19: #{tpu_custom_call.1} parent=1 // pred_check_branch
      %40 = sbr.rel (0) target = $region21
    $region20: #{tpu_custom_call.1} parent=1 // pred_region
      %42 = dma.done [#allocation4], 512
    $region21: #{tpu_custom_call.1} parent=1 // pred_fallthru
      _
    // Predicated region
    $region22: #{tpu_custom_call.1} parent=1 // pred_check
      _
    $region23: #{tpu_custom_call.1} parent=1 // pred_check_branch
      %44 = sbr.rel (0) target = $region25
    $region24: #{tpu_custom_call.1} parent=1 // pred_region
      %46 = dma.done [#allocation6], 128
    $region25: #{tpu_custom_call.1} parent=1 // pred_fallthru
      _
    %p49 = scmp.eq.s32.totalorder 0, 0
    // Predicated region
    $region26: #{tpu_custom_call.1} parent=1 // pred_check
      %p50 = pneg %p49
    $region27: #{tpu_custom_call.1} parent=1 // pred_check_branch
      %52 = sbr.rel (%p50) target = $region29
    $region28: #{tpu_custom_call.1} parent=1 // pred_region
      %vm53 = vcmask 7168
      %54 = vst.msk [vmem:[#allocation2] sm:$0xff] %vm53, 0.0
      %55 = vst.msk [vmem:[#allocation2 + $0x8] sm:$0xff] %vm53, 0.0
      %56 = vst.msk [vmem:[#allocation2 + $0x10] sm:$0xff] %vm53, 0.0
      %57 = vst.msk [vmem:[#allocation2 + $0x18] sm:$0xff] %vm53, 0.0
    $region29: #{tpu_custom_call.1} parent=1 // pred_fallthru
      _
    %v58 = vld [vmem:[#allocation5] sm:$0xff]
    %vm59 = vnez %v58
    %v60 = vld [vmem:[%s0] sm:$0xff]
    %v61 = vld [vmem:[%s0 + $0x8] sm:$0xff]
    %v62 = vld [vmem:[%s0 + $0x10] sm:$0xff]
    %v63 = vld [vmem:[%s0 + $0x18] sm:$0xff]
    %v64 = vlog2.pop %v60
    %v65 = vmul.f32 %v64, 0.6931472
    %v66 = vlog2.pop %v61
    %v67 = vmul.f32 %v66, 0.6931472
    %v68 = vlog2.pop %v62
    %v69 = vmul.f32 %v68, 0.6931472
    %v70 = vlog2.pop %v63
    %v71 = vmul.f32 %v70, 0.6931472
    %v72 = vld [vmem:[#allocation3] sm:$0xff]
    %v73 = vld [vmem:[#allocation3 + $0x8] sm:$0xff]
    %v74 = vld [vmem:[#allocation3 + $0x10] sm:$0xff]
    %v75 = vld [vmem:[#allocation3 + $0x18] sm:$0xff]
    %v76 = vlog2.pop %v72
    %v77 = vmul.f32 %v76, 0.6931472
    %v78 = vlog2.pop %v73
    %v79 = vmul.f32 %v78, 0.6931472
    %v80 = vlog2.pop %v74
    %v81 = vmul.f32 %v80, 0.6931472
    %v82 = vlog2.pop %v75
    %v83 = vmul.f32 %v82, 0.6931472
    %v84 = vsub.f32 %v65, %v77
    %v85 = vsub.f32 %v67, %v79
    %v86 = vsub.f32 %v69, %v81
    %v87 = vsub.f32 %v71, %v83
    %v88 = vsel %vm59, 16843009, 0
    %v89 = vunpack.c.0.s8 %v88
    %v90 = vunpack.c.1.s8 %v88
    %v91 = vunpack.c.2.s8 %v88
    %v92 = vunpack.c.3.s8 %v88
    %v93 = vpack.c.b16 %v89, %v89
    %v94 = vpack.c.b8 %v93, %v93
    %v95 = vpack.c.b16 %v90, %v90
    %v96 = vpack.c.b8 %v95, %v95
    %v97 = vpack.c.b16 %v91, %v91
    %v98 = vpack.c.b8 %v97, %v97
    %v99 = vpack.c.b16 %v92, %v92
    %v100 = vpack.c.b8 %v99, %v99
    %vm101 = vnez %v94
    %vm102 = vnez %v96
    %vm103 = vnez %v98
    %vm104 = vnez %v100
    %v105 = vsel %vm101, 16843009, 0
    %v106 = vsel %vm102, 16843009, 0
    %v107 = vsel %vm103, 16843009, 0
    %v108 = vsel %vm104, 16843009, 0
    %v109 = vunpack.c.0.s8 %v105
    %v110 = vunpack.c.0.s8 %v106
    %v111 = vunpack.c.0.s8 %v107
    %v112 = vunpack.c.0.s8 %v108
    %vm113 = vcmp.ne.s32.totalorder %v109, 0
    %vm114 = vcmp.ne.s32.totalorder %v110, 0
    %vm115 = vcmp.ne.s32.totalorder %v111, 0
    %vm116 = vcmp.ne.s32.totalorder %v112, 0
    %v117 = vsel %vm113, %v84, 0.0
    %v118 = vsel %vm114, %v85, 0.0
    %v119 = vsel %vm115, %v86, 0.0
    %v120 = vsel %vm116, %v87, 0.0
    %v121 = vld [vmem:[#allocation2] sm:$0xff]
    %v122 = vld [vmem:[#allocation2 + $0x8] sm:$0xff]
    %v123 = vld [vmem:[#allocation2 + $0x10] sm:$0xff]
    %v124 = vld [vmem:[#allocation2 + $0x18] sm:$0xff]
    %v125 = vmul.f32 %v117, %v117
    %v126 = vmul.f32 %v118, %v118
    %v127 = vmul.f32 %v119, %v119
    %v128 = vmul.f32 %v120, %v120
    %129 = vadd.xlane.f32.xlu0 %v125
    %v130 = vpop.xlane.xlu0 %129
    %131 = vadd.xlane.f32.xlu0 %v126
    %v132 = vpop.xlane.xlu0 %131
    %133 = vadd.xlane.f32.xlu0 %v127
    %v134 = vpop.xlane.xlu0 %133
    %135 = vadd.xlane.f32.xlu0 %v128
    %v136 = vpop.xlane.xlu0 %135
    %v137 = vadd.f32 %v121, %v130
    %v138 = vadd.f32 %v122, %v132
    %v139 = vadd.f32 %v123, %v134
    %v140 = vadd.f32 %v124, %v136
    %vm141 = vcmask 7168
    %142 = vst.msk [vmem:[#allocation2] sm:$0xff] %vm141, %v137
    %143 = vst.msk [vmem:[#allocation2 + $0x8] sm:$0xff] %vm141, %v138
    %144 = vst.msk [vmem:[#allocation2 + $0x10] sm:$0xff] %vm141, %v139
    %145 = vst.msk [vmem:[#allocation2 + $0x18] sm:$0xff] %vm141, %v140
    // Predicated region
    $region30: #{tpu_custom_call.1} parent=1 // pred_check
      %p146 = pneg %p49
    $region31: #{tpu_custom_call.1} parent=1 // pred_check_branch
      %148 = sbr.rel (%p146) target = $region33
    $region32: #{tpu_custom_call.1} parent=1 // pred_region
      %v149 = vld [vmem:[#allocation2] sm:$0xff]
      %v150 = vld [vmem:[#allocation2 + $0x8] sm:$0xff]
      %v151 = vld [vmem:[#allocation2 + $0x10] sm:$0xff]
      %v152 = vld [vmem:[#allocation2 + $0x18] sm:$0xff]
      %v153 = vld [vmem:[%s3] sm:$0xff]
      %v154 = vld [vmem:[%s3 + $0x8] sm:$0xff]
      %v155 = vld [vmem:[%s3 + $0x10] sm:$0xff]
      %v156 = vld [vmem:[%s3 + $0x18] sm:$0xff]
      %v157 = vmax.f32 %v153, 1.0
      %v158 = vmax.f32 %v154, 1.0
      %v159 = vmax.f32 %v155, 1.0
      %v160 = vmax.f32 %v156, 1.0
      %v161 = vrcp.pop %v157
      %v162 = vmul.f32 %v157, %v161
      %v163 = vsub.f32 1.0, %v162
      %v164 = vmul.f32 %v161, %v163
      %v165 = vadd.f32 %v161, %v164
      %vm166 = vweird.f32 %v157
      %vm167 = vweird.f32 %v161
      %vm168 = vmor %vm166, %vm167
      %v169 = vsel %vm168, %v161, %v165
      %v170 = vand.u32 2147483647, %v157
      %vm171 = vcmp.eq.f32.partialorder %v170, 8.507059e+37
      %v172 = vand.u32 %v157, 2147483648
      %v173 = vor.u32 1.1754944e-38, %v172
      %v174 = vsel %vm171, %v173, %v169
      %v175 = vmul.f32 %v149, %v174
      %v176 = vrcp.pop %v158
      %v177 = vmul.f32 %v158, %v176
      %v178 = vsub.f32 1.0, %v177
      %v179 = vmul.f32 %v176, %v178
      %v180 = vadd.f32 %v176, %v179
      %vm181 = vweird.f32 %v158
      %vm182 = vweird.f32 %v176
      %vm183 = vmor %vm181, %vm182
      %v184 = vsel %vm183, %v176, %v180
      %v185 = vand.u32 2147483647, %v158
      %vm186 = vcmp.eq.f32.partialorder %v185, 8.507059e+37
      %v187 = vand.u32 %v158, 2147483648
      %v188 = vor.u32 1.1754944e-38, %v187
      %v189 = vsel %vm186, %v188, %v184
      %v190 = vmul.f32 %v150, %v189
      %v191 = vrcp.pop %v159
      %v192 = vmul.f32 %v159, %v191
      %v193 = vsub.f32 1.0, %v192
      %v194 = vmul.f32 %v191, %v193
      %v195 = vadd.f32 %v191, %v194
      %vm196 = vweird.f32 %v159
      %vm197 = vweird.f32 %v191
      %vm198 = vmor %vm196, %vm197
      %v199 = vsel %vm198, %v191, %v195
      %v200 = vand.u32 2147483647, %v159
      %vm201 = vcmp.eq.f32.partialorder %v200, 8.507059e+37
      %v202 = vand.u32 %v159, 2147483648
      %v203 = vor.u32 1.1754944e-38, %v202
      %v204 = vsel %vm201, %v203, %v199
      %v205 = vmul.f32 %v151, %v204
      %v206 = vrcp.pop %v160
      %v207 = vmul.f32 %v160, %v206
      %v208 = vsub.f32 1.0, %v207
      %v209 = vmul.f32 %v206, %v208
      %v210 = vadd.f32 %v206, %v209
      %vm211 = vweird.f32 %v160
      %vm212 = vweird.f32 %v206
      %vm213 = vmor %vm211, %vm212
      %v214 = vsel %vm213, %v206, %v210
      %v215 = vand.u32 2147483647, %v160
      %vm216 = vcmp.eq.f32.partialorder %v215, 8.507059e+37
      %v217 = vand.u32 %v160, 2147483648
      %v218 = vor.u32 1.1754944e-38, %v217
      %v219 = vsel %vm216, %v218, %v214
      %v220 = vmul.f32 %v152, %v219
      %221 = vst.msk [vmem:[%s4] sm:$0xff] %vm141, %v175
      %222 = vst.msk [vmem:[%s4 + $0x8] sm:$0xff] %vm141, %v190
      %223 = vst.msk [vmem:[%s4 + $0x10] sm:$0xff] %vm141, %v205
      %224 = vst.msk [vmem:[%s4 + $0x18] sm:$0xff] %vm141, %v220
    $region33: #{tpu_custom_call.1} parent=1 // pred_fallthru
      _
    // Predicated region
    $region34: #{tpu_custom_call.1} parent=1 // pred_check
      _
    $region35: #{tpu_custom_call.1} parent=1 // pred_check_branch
      %226 = sbr.rel (0) target = $region37
    $region36: #{tpu_custom_call.1} parent=1 // pred_region
      _
    $region37: #{tpu_custom_call.1} parent=1 // pred_fallthru
      _
    // Predicated region
    $region38: #{tpu_custom_call.1} parent=1 // pred_check
      _
    $region39: #{tpu_custom_call.1} parent=1 // pred_check_branch
      %228 = sbr.rel (0) target = $region41
    $region40: #{tpu_custom_call.1} parent=1 // pred_region
      _
    $region41: #{tpu_custom_call.1} parent=1 // pred_fallthru
      _
    %229 = vsyncpa [#allocation4], 1
    %230 = vsyncpa [#allocation6], 1

</llo_original>
